<compile_context>
chip_gen: v6e
topology: v6e:2x2x1
jax: 0.10.0
libtpu: 0.0.40
codegen_flags: <defaults>
</compile_context>

<pallas_src>
import jax
import jax.numpy as jnp
from jax.experimental import pallas as pl
from jax.experimental.pallas import tpu as pltpu


def _treelstm_kernel(hl_ref, hr_ref, cl_ref, cr_ref, wl_ref, wr_ref, b_ref,
                     h_ref, c_ref):
    """TreeLSTM composition on one (TM, H) row tile.

    Gates are computed one at a time as lane-aligned (TM, H) matmul outputs:
        gate_g = hl @ Wl[g] + hr @ Wr[g] + b[g]
    (+1.0 forget-gate bias is already folded into b for g in {1, 2}).
    """
    hl = hl_ref[...]                                   # native dtype -> MXU
    hr = hr_ref[...]
    cl = cl_ref[...].astype(jnp.float32)               # gate math in f32
    cr = cr_ref[...].astype(jnp.float32)

    def gate(g):
        return (jnp.dot(hl, wl_ref[g], preferred_element_type=jnp.float32)
                + jnp.dot(hr, wr_ref[g], preferred_element_type=jnp.float32)
                + b_ref[g].astype(jnp.float32))        # (TM, H)

    i_g = gate(0)
    fl_g = gate(1)   # forget-left  (bias already includes +1.0)
    fr_g = gate(2)   # forget-right (bias already includes +1.0)
    u_g = gate(3)
    o_g = gate(4)

    c = (cl * jax.nn.sigmoid(fl_g)
         + cr * jax.nn.sigmoid(fr_g)
         + jnp.tanh(u_g) * jax.nn.sigmoid(i_g))
    h = jax.nn.sigmoid(o_g) * jnp.tanh(c)

    c_ref[...] = c.astype(c_ref.dtype)
    h_ref[...] = h.astype(h_ref.dtype)


def binary_tree_lstm_layer(l, r, weight, bias):
    """Pallas implementation of BinaryTreeLSTMLayer.forward (composition_ln=False).

    Args:
      l: (hl, cl) tuple, each (B, L, H)
      r: (hr, cr) tuple, each (B, L, H)
      weight: comp_linear weight, PyTorch layout (5H, 2H)
      bias:   comp_linear bias, (5H,)
    Returns:
      (h, c), each (B, L, H)
    """
    hl, cl = l
    hr, cr = r
    B, L, H = hl.shape
    M = B * L
    itemsize = jnp.dtype(hl.dtype).itemsize
    w_itemsize = jnp.dtype(weight.dtype).itemsize
    b_itemsize = jnp.dtype(bias.dtype).itemsize

    # ---- weight / bias prep (outside kernel, constant-folded by XLA) -------
    # v = [hl, hr] @ W^T + b  ==  hl @ Wl + hr @ Wr + b, split per gate.
    wt = weight.T                                        # (2H, 5H)
    wl = wt[:H, :].reshape(H, 5, H).transpose(1, 0, 2)   # (5, H, H), acts on hl
    wr = wt[H:, :].reshape(H, 5, H).transpose(1, 0, 2)   # (5, H, H), acts on hr
    b = bias.reshape(5, 1, H)
    # Fold the +1.0 forget-gate bias into gates 1 (fl) and 2 (fr).
    forget_off = jnp.zeros((5, 1, H), dtype=b.dtype).at[1:3].set(1.0)
    b = b + forget_off

    # ---- VMEM budget & tile sizing -----------------------------------------
    # Resident (constant index_map) operands: wl, wr, b.  Assume worst case
    # double-buffering by the pipeliner when budgeting.
    resident_bytes = 2 * (2 * 5 * H * H * w_itemsize + 5 * H * b_itemsize)
    headroom = 2 * 1024 * 1024
    default_limit = 16 * 1024 * 1024      # smallest default scoped-VMEM (v5e)
    ceiling = 56 * 1024 * 1024            # stays safely under v7x's 64 MiB VMEM

    # 6 streamed arrays (4 in, 2 out) x 2 pipeline buffers x TM*H*itemsize.
    per_row_stream = 12 * H * itemsize
    stream_budget = max(ceiling - resident_bytes - headroom, 8 * per_row_stream)
    TM = int(min(1024, max(8, stream_budget // per_row_stream)))
    TM = max(8, (TM // 8) * 8)
    m_pad8 = ((M + 7) // 8) * 8
    TM = min(TM, m_pad8)
    M_pad = ((M + TM - 1) // TM) * TM
    num_tiles = M_pad // TM

    total_vmem = TM * per_row_stream + resident_bytes + headroom
    compiler_params = dict(dimension_semantics=("parallel",))
    if total_vmem > default_limit:
        compiler_params["vmem_limit_bytes"] = int(min(total_vmem, ceiling + headroom))

    def flat_pad(x):
        xf = x.reshape(M, H)
        if M_pad != M:
            xf = jnp.pad(xf, ((0, M_pad - M), (0, 0)))
        return xf

    row_spec = pl.BlockSpec((TM, H), lambda i: (i, 0))
    w_spec = pl.BlockSpec((5, H, H), lambda i: (0, 0, 0))   # resident weights
    b_spec = pl.BlockSpec((5, 1, H), lambda i: (0, 0, 0))   # resident bias

    cost = pl.CostEstimate(
        flops=20 * M * H * H,
        transcendentals=5 * M * H,
        bytes_accessed=(6 * M * H * itemsize
                        + 2 * 5 * H * H * w_itemsize
                        + 5 * H * b_itemsize),
    )

    h_flat, c_flat = pl.pallas_call(
        _treelstm_kernel,
        out_shape=[
            jax.ShapeDtypeStruct((M_pad, H), hl.dtype),
            jax.ShapeDtypeStruct((M_pad, H), hl.dtype),
        ],
        grid=(num_tiles,),
        in_specs=[row_spec, row_spec, row_spec, row_spec, w_spec, w_spec, b_spec],
        out_specs=[row_spec, row_spec],
        compiler_params=pltpu.CompilerParams(**compiler_params),
        cost_estimate=cost,
    )(flat_pad(hl), flat_pad(hr), flat_pad(cl), flat_pad(cr), wl, wr, b)

    h = h_flat[:M].reshape(B, L, H)
    c = c_flat[:M].reshape(B, L, H)
    return h, c


def _reference(l, r, weight, bias):
    """Plain-JAX reference mirroring the PyTorch forward exactly."""
    hl, cl = l
    hr, cr = r
    hlr = jnp.concatenate([hl, hr], axis=2)                    # (B, L, 2H)
    v = jnp.einsum('blk,gk->blg', hlr, weight) + bias          # (B, L, 5H)
    i, fl, fr, u, o = jnp.split(v, 5, axis=2)
    c = (cl * jax.nn.sigmoid(fl + 1.0)
         + cr * jax.nn.sigmoid(fr + 1.0)
         + jnp.tanh(u) * jax.nn.sigmoid(i))
    h = jax.nn.sigmoid(o) * jnp.tanh(c)
    return h, c


if __name__ == "__main__":
    # Small shapes consistent with the module's forward contract.
    B, L, H = 2, 8, 32
    key = jax.random.PRNGKey(0)
    k_hl, k_cl, k_hr, k_cr, k_w = jax.random.split(key, 5)

    hl = jax.random.normal(k_hl, (B, L, H), dtype=jnp.float32)
    cl = jax.random.normal(k_cl, (B, L, H), dtype=jnp.float32)
    hr = jax.random.normal(k_hr, (B, L, H), dtype=jnp.float32)
    cr = jax.random.normal(k_cr, (B, L, H), dtype=jnp.float32)

    # Deterministic HeKaiming-style init for comp_linear: (5H, 2H) weight, zero bias.
    fan_in = 2 * H
    weight = jax.random.normal(k_w, (5 * H, 2 * H), dtype=jnp.float32) * jnp.sqrt(2.0 / fan_in)
    bias = jnp.zeros((5 * H,), dtype=jnp.float32)

    h_out, c_out = binary_tree_lstm_layer((hl, cl), (hr, cr), weight, bias)
    jax.block_until_ready((h_out, c_out))

    h_ref, c_ref = _reference((hl, cl), (hr, cr), weight, bias)
    assert h_out.shape == (B, L, H) and c_out.shape == (B, L, H)
    assert jnp.allclose(h_out, h_ref, atol=1e-5, rtol=1e-5)
    assert jnp.allclose(c_out, c_ref, atol=1e-5, rtol=1e-5)

    print("KERNEL_OK")
</pallas_src>

<mosaic_0001>
module attributes {stable_mosaic.version = 11 : i64} {
  func.func @_treelstm_kernel(%arg0: i32, %arg1: memref<16x32xf32, #tpu.memory_space<vmem>>, %arg2: memref<16x32xf32, #tpu.memory_space<vmem>>, %arg3: memref<16x32xf32, #tpu.memory_space<vmem>>, %arg4: memref<16x32xf32, #tpu.memory_space<vmem>>, %arg5: memref<5x32x32xf32, #tpu.memory_space<vmem>>, %arg6: memref<5x32x32xf32, #tpu.memory_space<vmem>>, %arg7: memref<5x1x32xf32, #tpu.memory_space<vmem>>, %arg8: memref<16x32xf32, #tpu.memory_space<vmem>>, %arg9: memref<16x32xf32, #tpu.memory_space<vmem>>) attributes {dimension_semantics = [#tpu.dimension_semantics<parallel>], iteration_bounds = array<i64: 1>, scalar_prefetch = 0 : i64, scratch_operands = 0 : i64, tpu.core_type = #tpu.core_type<tc>, window_params = [{transform_indices = @transform_0, window_bounds = array<i64: 16, 32>}, {transform_indices = @transform_1, window_bounds = array<i64: 16, 32>}, {transform_indices = @transform_2, window_bounds = array<i64: 16, 32>}, {transform_indices = @transform_3, window_bounds = array<i64: 16, 32>}, {pipeline_mode = #tpu.pipeline_mode<synchronous>, transform_indices = @transform_4, window_bounds = array<i64: 5, 32, 32>}, {pipeline_mode = #tpu.pipeline_mode<synchronous>, transform_indices = @transform_5, window_bounds = array<i64: 5, 32, 32>}, {pipeline_mode = #tpu.pipeline_mode<synchronous>, transform_indices = @transform_6, window_bounds = array<i64: 5, 1, 32>}, {transform_indices = @transform_7, window_bounds = array<i64: 16, 32>}, {transform_indices = @transform_8, window_bounds = array<i64: 16, 32>}]} {
    %c0 = arith.constant 0 : index
    %c0_0 = arith.constant 0 : index
    %0 = vector.load %arg1[%c0, %c0_0] : memref<16x32xf32, #tpu.memory_space<vmem>>, vector<16x32xf32>
    %c0_1 = arith.constant 0 : index
    %c0_2 = arith.constant 0 : index
    %1 = vector.load %arg2[%c0_1, %c0_2] : memref<16x32xf32, #tpu.memory_space<vmem>>, vector<16x32xf32>
    %c0_3 = arith.constant 0 : index
    %c0_4 = arith.constant 0 : index
    %2 = vector.load %arg3[%c0_3, %c0_4] : memref<16x32xf32, #tpu.memory_space<vmem>>, vector<16x32xf32>
    %c0_5 = arith.constant 0 : index
    %c0_6 = arith.constant 0 : index
    %3 = vector.load %arg4[%c0_5, %c0_6] : memref<16x32xf32, #tpu.memory_space<vmem>>, vector<16x32xf32>
    %c0_7 = arith.constant 0 : index
    %c0_8 = arith.constant 0 : index
    %c0_9 = arith.constant 0 : index
    %4 = vector.load %arg5[%c0_7, %c0_8, %c0_9] : memref<5x32x32xf32, #tpu.memory_space<vmem>>, vector<1x32x32xf32>
    %5 = vector.shape_cast %4 : vector<1x32x32xf32> to vector<32x32xf32>
    %cst = arith.constant dense<0.000000e+00> : vector<16x32xf32>
    %6 = tpu.matmul %0, %5, %cst {dimension_numbers = #tpu.dot_dimension_numbers<[1], [0], [0], [1], [0, 0, 1, 1], [], []>} : vector<16x32xf32>, vector<32x32xf32>, vector<16x32xf32> -> vector<16x32xf32>
    %c0_10 = arith.constant 0 : index
    %c0_11 = arith.constant 0 : index
    %c0_12 = arith.constant 0 : index
    %7 = vector.load %arg6[%c0_10, %c0_11, %c0_12] : memref<5x32x32xf32, #tpu.memory_space<vmem>>, vector<1x32x32xf32>
    %8 = vector.shape_cast %7 : vector<1x32x32xf32> to vector<32x32xf32>
    %cst_13 = arith.constant dense<0.000000e+00> : vector<16x32xf32>
    %9 = tpu.matmul %1, %8, %cst_13 {dimension_numbers = #tpu.dot_dimension_numbers<[1], [0], [0], [1], [0, 0, 1, 1], [], []>} : vector<16x32xf32>, vector<32x32xf32>, vector<16x32xf32> -> vector<16x32xf32>
    %10 = arith.addf %6, %9 : vector<16x32xf32>
    %c0_14 = arith.constant 0 : index
    %c0_15 = arith.constant 0 : index
    %c0_16 = arith.constant 0 : index
    %11 = vector.load %arg7[%c0_14, %c0_15, %c0_16] : memref<5x1x32xf32, #tpu.memory_space<vmem>>, vector<1x1x32xf32>
    %12 = vector.shape_cast %11 : vector<1x1x32xf32> to vector<1x32xf32>
    %13 = vector.broadcast %12 : vector<1x32xf32> to vector<16x32xf32>
    %14 = arith.addf %10, %13 : vector<16x32xf32>
    %c1 = arith.constant 1 : index
    %c0_17 = arith.constant 0 : index
    %c0_18 = arith.constant 0 : index
    %15 = vector.load %arg5[%c1, %c0_17, %c0_18] : memref<5x32x32xf32, #tpu.memory_space<vmem>>, vector<1x32x32xf32>
    %16 = vector.shape_cast %15 : vector<1x32x32xf32> to vector<32x32xf32>
    %cst_19 = arith.constant dense<0.000000e+00> : vector<16x32xf32>
    %17 = tpu.matmul %0, %16, %cst_19 {dimension_numbers = #tpu.dot_dimension_numbers<[1], [0], [0], [1], [0, 0, 1, 1], [], []>} : vector<16x32xf32>, vector<32x32xf32>, vector<16x32xf32> -> vector<16x32xf32>
    %c1_20 = arith.constant 1 : index
    %c0_21 = arith.constant 0 : index
    %c0_22 = arith.constant 0 : index
    %18 = vector.load %arg6[%c1_20, %c0_21, %c0_22] : memref<5x32x32xf32, #tpu.memory_space<vmem>>, vector<1x32x32xf32>
    %19 = vector.shape_cast %18 : vector<1x32x32xf32> to vector<32x32xf32>
    %cst_23 = arith.constant dense<0.000000e+00> : vector<16x32xf32>
    %20 = tpu.matmul %1, %19, %cst_23 {dimension_numbers = #tpu.dot_dimension_numbers<[1], [0], [0], [1], [0, 0, 1, 1], [], []>} : vector<16x32xf32>, vector<32x32xf32>, vector<16x32xf32> -> vector<16x32xf32>
    %21 = arith.addf %17, %20 : vector<16x32xf32>
    %c1_24 = arith.constant 1 : index
    %c0_25 = arith.constant 0 : index
    %c0_26 = arith.constant 0 : index
    %22 = vector.load %arg7[%c1_24, %c0_25, %c0_26] : memref<5x1x32xf32, #tpu.memory_space<vmem>>, vector<1x1x32xf32>
    %23 = vector.shape_cast %22 : vector<1x1x32xf32> to vector<1x32xf32>
    %24 = vector.broadcast %23 : vector<1x32xf32> to vector<16x32xf32>
    %25 = arith.addf %21, %24 : vector<16x32xf32>
    %c2 = arith.constant 2 : index
    %c0_27 = arith.constant 0 : index
    %c0_28 = arith.constant 0 : index
    %26 = vector.load %arg5[%c2, %c0_27, %c0_28] : memref<5x32x32xf32, #tpu.memory_space<vmem>>, vector<1x32x32xf32>
    %27 = vector.shape_cast %26 : vector<1x32x32xf32> to vector<32x32xf32>
    %cst_29 = arith.constant dense<0.000000e+00> : vector<16x32xf32>
    %28 = tpu.matmul %0, %27, %cst_29 {dimension_numbers = #tpu.dot_dimension_numbers<[1], [0], [0], [1], [0, 0, 1, 1], [], []>} : vector<16x32xf32>, vector<32x32xf32>, vector<16x32xf32> -> vector<16x32xf32>
    %c2_30 = arith.constant 2 : index
    %c0_31 = arith.constant 0 : index
    %c0_32 = arith.constant 0 : index
    %29 = vector.load %arg6[%c2_30, %c0_31, %c0_32] : memref<5x32x32xf32, #tpu.memory_space<vmem>>, vector<1x32x32xf32>
    %30 = vector.shape_cast %29 : vector<1x32x32xf32> to vector<32x32xf32>
    %cst_33 = arith.constant dense<0.000000e+00> : vector<16x32xf32>
    %31 = tpu.matmul %1, %30, %cst_33 {dimension_numbers = #tpu.dot_dimension_numbers<[1], [0], [0], [1], [0, 0, 1, 1], [], []>} : vector<16x32xf32>, vector<32x32xf32>, vector<16x32xf32> -> vector<16x32xf32>
    %32 = arith.addf %28, %31 : vector<16x32xf32>
    %c2_34 = arith.constant 2 : index
    %c0_35 = arith.constant 0 : index
    %c0_36 = arith.constant 0 : index
    %33 = vector.load %arg7[%c2_34, %c0_35, %c0_36] : memref<5x1x32xf32, #tpu.memory_space<vmem>>, vector<1x1x32xf32>
    %34 = vector.shape_cast %33 : vector<1x1x32xf32> to vector<1x32xf32>
    %35 = vector.broadcast %34 : vector<1x32xf32> to vector<16x32xf32>
    %36 = arith.addf %32, %35 : vector<16x32xf32>
    %c3 = arith.constant 3 : index
    %c0_37 = arith.constant 0 : index
    %c0_38 = arith.constant 0 : index
    %37 = vector.load %arg5[%c3, %c0_37, %c0_38] : memref<5x32x32xf32, #tpu.memory_space<vmem>>, vector<1x32x32xf32>
    %38 = vector.shape_cast %37 : vector<1x32x32xf32> to vector<32x32xf32>
    %cst_39 = arith.constant dense<0.000000e+00> : vector<16x32xf32>
    %39 = tpu.matmul %0, %38, %cst_39 {dimension_numbers = #tpu.dot_dimension_numbers<[1], [0], [0], [1], [0, 0, 1, 1], [], []>} : vector<16x32xf32>, vector<32x32xf32>, vector<16x32xf32> -> vector<16x32xf32>
    %c3_40 = arith.constant 3 : index
    %c0_41 = arith.constant 0 : index
    %c0_42 = arith.constant 0 : index
    %40 = vector.load %arg6[%c3_40, %c0_41, %c0_42] : memref<5x32x32xf32, #tpu.memory_space<vmem>>, vector<1x32x32xf32>
    %41 = vector.shape_cast %40 : vector<1x32x32xf32> to vector<32x32xf32>
    %cst_43 = arith.constant dense<0.000000e+00> : vector<16x32xf32>
    %42 = tpu.matmul %1, %41, %cst_43 {dimension_numbers = #tpu.dot_dimension_numbers<[1], [0], [0], [1], [0, 0, 1, 1], [], []>} : vector<16x32xf32>, vector<32x32xf32>, vector<16x32xf32> -> vector<16x32xf32>
    %43 = arith.addf %39, %42 : vector<16x32xf32>
    %c3_44 = arith.constant 3 : index
    %c0_45 = arith.constant 0 : index
    %c0_46 = arith.constant 0 : index
    %44 = vector.load %arg7[%c3_44, %c0_45, %c0_46] : memref<5x1x32xf32, #tpu.memory_space<vmem>>, vector<1x1x32xf32>
    %45 = vector.shape_cast %44 : vector<1x1x32xf32> to vector<1x32xf32>
    %46 = vector.broadcast %45 : vector<1x32xf32> to vector<16x32xf32>
    %47 = arith.addf %43, %46 : vector<16x32xf32>
    %c4 = arith.constant 4 : index
    %c0_47 = arith.constant 0 : index
    %c0_48 = arith.constant 0 : index
    %48 = vector.load %arg5[%c4, %c0_47, %c0_48] : memref<5x32x32xf32, #tpu.memory_space<vmem>>, vector<1x32x32xf32>
    %49 = vector.shape_cast %48 : vector<1x32x32xf32> to vector<32x32xf32>
    %cst_49 = arith.constant dense<0.000000e+00> : vector<16x32xf32>
    %50 = tpu.matmul %0, %49, %cst_49 {dimension_numbers = #tpu.dot_dimension_numbers<[1], [0], [0], [1], [0, 0, 1, 1], [], []>} : vector<16x32xf32>, vector<32x32xf32>, vector<16x32xf32> -> vector<16x32xf32>
    %c4_50 = arith.constant 4 : index
    %c0_51 = arith.constant 0 : index
    %c0_52 = arith.constant 0 : index
    %51 = vector.load %arg6[%c4_50, %c0_51, %c0_52] : memref<5x32x32xf32, #tpu.memory_space<vmem>>, vector<1x32x32xf32>
    %52 = vector.shape_cast %51 : vector<1x32x32xf32> to vector<32x32xf32>
    %cst_53 = arith.constant dense<0.000000e+00> : vector<16x32xf32>
    %53 = tpu.matmul %1, %52, %cst_53 {dimension_numbers = #tpu.dot_dimension_numbers<[1], [0], [0], [1], [0, 0, 1, 1], [], []>} : vector<16x32xf32>, vector<32x32xf32>, vector<16x32xf32> -> vector<16x32xf32>
    %54 = arith.addf %50, %53 : vector<16x32xf32>
    %c4_54 = arith.constant 4 : index
    %c0_55 = arith.constant 0 : index
    %c0_56 = arith.constant 0 : index
    %55 = vector.load %arg7[%c4_54, %c0_55, %c0_56] : memref<5x1x32xf32, #tpu.memory_space<vmem>>, vector<1x1x32xf32>
    %56 = vector.shape_cast %55 : vector<1x1x32xf32> to vector<1x32xf32>
    %57 = vector.broadcast %56 : vector<1x32xf32> to vector<16x32xf32>
    %58 = arith.addf %54, %57 : vector<16x32xf32>
    %59 = arith.negf %25 : vector<16x32xf32>
    %60 = math.exp %59 : vector<16x32xf32>
    %cst_57 = arith.constant 1.000000e+00 : f32
    %61 = vector.broadcast %cst_57 : f32 to vector<16x32xf32>
    %62 = arith.addf %61, %60 : vector<16x32xf32>
    %63 = arith.divf %61, %62 : vector<16x32xf32>
    %64 = arith.mulf %2, %63 : vector<16x32xf32>
    %65 = arith.negf %36 : vector<16x32xf32>
    %66 = math.exp %65 : vector<16x32xf32>
    %cst_58 = arith.constant 1.000000e+00 : f32
    %67 = vector.broadcast %cst_58 : f32 to vector<16x32xf32>
    %68 = arith.addf %67, %66 : vector<16x32xf32>
    %69 = arith.divf %67, %68 : vector<16x32xf32>
    %70 = arith.mulf %3, %69 : vector<16x32xf32>
    %71 = arith.addf %64, %70 : vector<16x32xf32>
    %72 = math.tanh %47 : vector<16x32xf32>
    %73 = arith.negf %14 : vector<16x32xf32>
    %74 = math.exp %73 : vector<16x32xf32>
    %cst_59 = arith.constant 1.000000e+00 : f32
    %75 = vector.broadcast %cst_59 : f32 to vector<16x32xf32>
    %76 = arith.addf %75, %74 : vector<16x32xf32>
    %77 = arith.divf %75, %76 : vector<16x32xf32>
    %78 = arith.mulf %72, %77 : vector<16x32xf32>
    %79 = arith.addf %71, %78 : vector<16x32xf32>
    %80 = arith.negf %58 : vector<16x32xf32>
    %81 = math.exp %80 : vector<16x32xf32>
    %cst_60 = arith.constant 1.000000e+00 : f32
    %82 = vector.broadcast %cst_60 : f32 to vector<16x32xf32>
    %83 = arith.addf %82, %81 : vector<16x32xf32>
    %84 = arith.divf %82, %83 : vector<16x32xf32>
    %85 = math.tanh %79 : vector<16x32xf32>
    %86 = arith.mulf %84, %85 : vector<16x32xf32>
    %c0_61 = arith.constant 0 : index
    %c0_62 = arith.constant 0 : index
    %87 = vector.load %arg9[%c0_61, %c0_62] : memref<16x32xf32, #tpu.memory_space<vmem>>, vector<16x32xf32>
    tpu.vector_store %arg9[%c0_61, %c0_62], %79 {strides = array<i32>} : memref<16x32xf32, #tpu.memory_space<vmem>>, vector<16x32xf32>,
    %c0_63 = arith.constant 0 : index
    %c0_64 = arith.constant 0 : index
    %88 = vector.load %arg8[%c0_63, %c0_64] : memref<16x32xf32, #tpu.memory_space<vmem>>, vector<16x32xf32>
    tpu.vector_store %arg8[%c0_63, %c0_64], %86 {strides = array<i32>} : memref<16x32xf32, #tpu.memory_space<vmem>>, vector<16x32xf32>,
    return
  }
  func.func @transform_0(%arg0: i32) -> (i32, i32) {
    %c0_i32 = arith.constant 0 : i32
    %c0_i32_0 = arith.constant 0 : i32
    return %arg0, %c0_i32 : i32, i32
  }
  func.func @transform_1(%arg0: i32) -> (i32, i32) {
    %c0_i32 = arith.constant 0 : i32
    %c0_i32_0 = arith.constant 0 : i32
    return %arg0, %c0_i32 : i32, i32
  }
  func.func @transform_2(%arg0: i32) -> (i32, i32) {
    %c0_i32 = arith.constant 0 : i32
    %c0_i32_0 = arith.constant 0 : i32
    return %arg0, %c0_i32 : i32, i32
  }
  func.func @transform_3(%arg0: i32) -> (i32, i32) {
    %c0_i32 = arith.constant 0 : i32
    %c0_i32_0 = arith.constant 0 : i32
    return %arg0, %c0_i32 : i32, i32
  }
  func.func @transform_4(%arg0: i32) -> (i32, i32, i32) {
    %c0_i32 = arith.constant 0 : i32
    %c0_i32_0 = arith.constant 0 : i32
    %c0_i32_1 = arith.constant 0 : i32
    %c0_i32_2 = arith.constant 0 : i32
    return %c0_i32, %c0_i32_0, %c0_i32_1 : i32, i32, i32
  }
  func.func @transform_5(%arg0: i32) -> (i32, i32, i32) {
    %c0_i32 = arith.constant 0 : i32
    %c0_i32_0 = arith.constant 0 : i32
    %c0_i32_1 = arith.constant 0 : i32
    %c0_i32_2 = arith.constant 0 : i32
    return %c0_i32, %c0_i32_0, %c0_i32_1 : i32, i32, i32
  }
  func.func @transform_6(%arg0: i32) -> (i32, i32, i32) {
    %c0_i32 = arith.constant 0 : i32
    %c0_i32_0 = arith.constant 0 : i32
    %c0_i32_1 = arith.constant 0 : i32
    %c0_i32_2 = arith.constant 0 : i32
    return %c0_i32, %c0_i32_0, %c0_i32_1 : i32, i32, i32
  }
  func.func @transform_7(%arg0: i32) -> (i32, i32) {
    %c0_i32 = arith.constant 0 : i32
    %c0_i32_0 = arith.constant 0 : i32
    return %arg0, %c0_i32 : i32, i32
  }
  func.func @transform_8(%arg0: i32) -> (i32, i32) {
    %c0_i32 = arith.constant 0 : i32
    %c0_i32_0 = arith.constant 0 : i32
    return %arg0, %c0_i32 : i32, i32
  }
}

</mosaic_0001>

<llo_original>
// kernel: tpu_custom_call.1
$region0: #{tpu_custom_call.1}
  #allocation0 [shape = 'u32[]', space=smem, size = 0x4, offset = 0x4, fixed_abs, tag = 'smem constant byte address 0x4 - core index']
  #allocation1 [shape = 'u32[144,128]{1,0:T(1,128)}', space=vmem, size = 0x12000, scoped, tag = 'internal scratch']
  %s0 = inlined_call_operand.hbm [shape: f32[16,32], index: 0, kind: input, shape index: {}]
  %s1 = inlined_call_operand.hbm [shape: f32[16,32], index: 1, kind: input, shape index: {}]
  %s2 = inlined_call_operand.hbm [shape: f32[16,32], index: 2, kind: input, shape index: {}]
  %s3 = inlined_call_operand.hbm [shape: f32[16,32], index: 3, kind: input, shape index: {}]
  %s4 = inlined_call_operand.hbm [shape: f32[5,32,32], index: 4, kind: input, shape index: {}]
  %s5 = inlined_call_operand.hbm [shape: f32[5,32,32], index: 5, kind: input, shape index: {}]
  %s6 = inlined_call_operand.vmem [shape: f32[5,1,32], index: 6, kind: input, shape index: {}]
  %s7 = inlined_call_operand.hbm [shape: f32[16,32], index: 7, kind: output, shape index: {0}]
  %s8 = inlined_call_operand.hbm [shape: f32[16,32], index: 8, kind: output, shape index: {1}]
  %9 = xla_tuple %s7, %s8
  %s10 = sld [smem:[#allocation0]]
  $region70: #{tpu_custom_call.1} parent=0
    _
  %s12 = ssub.s32 1, %s10
  %s13 = scalar_select 0, %s12, %s10
  $region1: #{tpu_custom_call.1} parent=0
    #allocation2 [shape = 'u8[8192]{0}', space=vmem, size = 0x2000, scoped, tag = 'input window, operand 0, single buffered']
    #allocation3 [shape = 's32[1]{0}', space=sflag, size = 0x4, scoped, tag = 'scoped memory for tpu_custom_call.1']
    #allocation4 [shape = 's32[1]{0}', space=sflag, size = 0x4, scoped, tag = 'scoped memory for tpu_custom_call.1']
    #allocation5 [shape = 'u8[8192]{0}', space=vmem, size = 0x2000, scoped, tag = 'input window, operand 1, single buffered']
    #allocation6 [shape = 's32[1]{0}', space=sflag, size = 0x4, scoped, tag = 'scoped memory for tpu_custom_call.1']
    #allocation7 [shape = 'u8[8192]{0}', space=vmem, size = 0x2000, scoped, tag = 'input window, operand 2, single buffered']
    #allocation8 [shape = 'u8[8192]{0}', space=vmem, size = 0x2000, scoped, tag = 'input window, operand 3, single buffered']
    #allocation9 [shape = 's32[1]{0}', space=sflag, size = 0x4, scoped, tag = 'scoped memory for tpu_custom_call.1']
    #allocation10 [shape = 'u8[81920]{0}', space=vmem, size = 0x14000, scoped, tag = 'input window, operand 4, single buffered']
    #allocation11 [shape = 'u8[81920]{0}', space=vmem, size = 0x14000, scoped, tag = 'input window, operand 5, single buffered']
    #allocation12 [shape = 's32[1]{0}', space=sflag, size = 0x4, scoped, tag = 'scoped memory for tpu_custom_call.1']
    #allocation13 [shape = 'u8[8192]{0}', space=vmem, size = 0x2000, scoped, tag = 'output window, operand 0, single buffered']
    #allocation14 [shape = 'u8[8192]{0}', space=vmem, size = 0x2000, scoped, tag = 'output window, operand 1, single buffered']
    #allocation15 [shape = 's32[1]{0}', space=sflag, size = 0x4, scoped, tag = 'scoped memory for tpu_custom_call.1']
    %14 = vsyncpa [#allocation3], 0
    %15 = vsyncpa [#allocation6], 0
    %16 = vsyncpa [#allocation9], 0
    %17 = vsyncpa [#allocation12], 0
    %18 = vsyncpa [#allocation4], 0
    %19 = vsyncpa [#allocation15], 0
    // Predicated region
    $region2: #{tpu_custom_call.1} parent=1 // pred_check
      _
    $region3: #{tpu_custom_call.1} parent=1 // pred_check_branch
      %21 = sbr.rel (0) target = $region5
    $region4: #{tpu_custom_call.1} parent=1 // pred_region
      %s23 = ssub.s32 256, 256
      %24 = vsyncadd [#allocation3], %s23
      %s25 = sshll.u32 [#allocation2], 4
      %s26 = int_to_ptr.vmem [resolvable:$true] %s25
      %31 = dma.hbm_to_vmem [thread:$0]  %s0, 256, %s26, [#allocation3], 128, 128, 8
    $region5: #{tpu_custom_call.1} parent=1 // pred_fallthru
      _
    // Predicated region
    $region6: #{tpu_custom_call.1} parent=1 // pred_check
      _
    $region7: #{tpu_custom_call.1} parent=1 // pred_check_branch
      %33 = sbr.rel (0) target = $region9
    $region8: #{tpu_custom_call.1} parent=1 // pred_region
      %s35 = ssub.s32 256, 256
      %36 = vsyncadd [#allocation6], %s35
      %s37 = sshll.u32 [#allocation5], 4
      %s38 = int_to_ptr.vmem [resolvable:$true] %s37
      %43 = dma.hbm_to_vmem [thread:$0]  %s1, 256, %s38, [#allocation6], 128, 128, 8
    $region9: #{tpu_custom_call.1} parent=1 // pred_fallthru
      _
    // Predicated region
    $region10: #{tpu_custom_call.1} parent=1 // pred_check
      _
    $region11: #{tpu_custom_call.1} parent=1 // pred_check_branch
      %45 = sbr.rel (0) target = $region13
    $region12: #{tpu_custom_call.1} parent=1 // pred_region
      %s47 = ssub.s32 256, 256
      %48 = vsyncadd [#allocation6], %s47
      %s49 = sshll.u32 [#allocation7], 4
      %s50 = int_to_ptr.vmem [resolvable:$true] %s49
      %55 = dma.hbm_to_vmem [thread:$0]  %s2, 256, %s50, [#allocation6], 128, 128, 8
    $region13: #{tpu_custom_call.1} parent=1 // pred_fallthru
      _
    // Predicated region
    $region14: #{tpu_custom_call.1} parent=1 // pred_check
      _
    $region15: #{tpu_custom_call.1} parent=1 // pred_check_branch
      %57 = sbr.rel (0) target = $region17
    $region16: #{tpu_custom_call.1} parent=1 // pred_region
      %s59 = ssub.s32 256, 256
      %60 = vsyncadd [#allocation9], %s59
      %s61 = sshll.u32 [#allocation8], 4
      %s62 = int_to_ptr.vmem [resolvable:$true] %s61
      %67 = dma.hbm_to_vmem [thread:$0]  %s3, 256, %s62, [#allocation9], 128, 128, 8
    $region17: #{tpu_custom_call.1} parent=1 // pred_fallthru
      _
    // Predicated region
    $region18: #{tpu_custom_call.1} parent=1 // pred_check
      _
    $region19: #{tpu_custom_call.1} parent=1 // pred_check_branch
      %69 = sbr.rel (0) target = $region21
    $region20: #{tpu_custom_call.1} parent=1 // pred_region
      %s71 = ssub.s32 2560, 2560
      %72 = vsyncadd [#allocation9], %s71
      %s73 = sshll.u32 [#allocation10], 4
      %s74 = int_to_ptr.vmem [resolvable:$true] %s73
      %79 = dma.hbm_to_vmem [thread:$0]  %s4, 2560, %s74, [#allocation9], 128, 128, 8
    $region21: #{tpu_custom_call.1} parent=1 // pred_fallthru
      _
    // Predicated region
    $region22: #{tpu_custom_call.1} parent=1 // pred_check
      _
    $region23: #{tpu_custom_call.1} parent=1 // pred_check_branch
      %81 = sbr.rel (0) target = $region25
    $region24: #{tpu_custom_call.1} parent=1 // pred_region
      %s83 = ssub.s32 2560, 2560
      %84 = vsyncadd [#allocation12], %s83
      %s85 = sshll.u32 [#allocation11], 4
      %s86 = int_to_ptr.vmem [resolvable:$true] %s85
      %91 = dma.hbm_to_vmem [thread:$0]  %s5, 2560, %s86, [#allocation12], 128, 128, 8
    $region25: #{tpu_custom_call.1} parent=1 // pred_fallthru
      _
    // Predicated region
    $region26: #{tpu_custom_call.1} parent=1 // pred_check
      _
    $region27: #{tpu_custom_call.1} parent=1 // pred_check_branch
      %93 = sbr.rel (0) target = $region29
    $region28: #{tpu_custom_call.1} parent=1 // pred_region
      _
    $region29: #{tpu_custom_call.1} parent=1 // pred_fallthru
      _
    // Predicated region
    $region30: #{tpu_custom_call.1} parent=1 // pred_check
      _
    $region31: #{tpu_custom_call.1} parent=1 // pred_check_branch
      %95 = sbr.rel (0) target = $region33
    $region32: #{tpu_custom_call.1} parent=1 // pred_region
      %96 = dma.done [#allocation3], 256
    $region33: #{tpu_custom_call.1} parent=1 // pred_fallthru
      _
    // Predicated region
    $region34: #{tpu_custom_call.1} parent=1 // pred_check
      _
    $region35: #{tpu_custom_call.1} parent=1 // pred_check_branch
      %98 = sbr.rel (0) target = $region37
    $region36: #{tpu_custom_call.1} parent=1 // pred_region
      %99 = dma.done [#allocation6], 256
    $region37: #{tpu_custom_call.1} parent=1 // pred_fallthru
      _
    // Predicated region
    $region38: #{tpu_custom_call.1} parent=1 // pred_check
      _
    $region39: #{tpu_custom_call.1} parent=1 // pred_check_branch
      %101 = sbr.rel (0) target = $region41
    $region40: #{tpu_custom_call.1} parent=1 // pred_region
      %102 = dma.done [#allocation6], 256
    $region41: #{tpu_custom_call.1} parent=1 // pred_fallthru
      _
    // Predicated region
    $region42: #{tpu_custom_call.1} parent=1 // pred_check
      _
    $region43: #{tpu_custom_call.1} parent=1 // pred_check_branch
      %104 = sbr.rel (0) target = $region45
    $region44: #{tpu_custom_call.1} parent=1 // pred_region
      %105 = dma.done [#allocation9], 256
    $region45: #{tpu_custom_call.1} parent=1 // pred_fallthru
      _
    // Predicated region
    $region46: #{tpu_custom_call.1} parent=1 // pred_check
      _
    $region47: #{tpu_custom_call.1} parent=1 // pred_check_branch
      %107 = sbr.rel (0) target = $region49
    $region48: #{tpu_custom_call.1} parent=1 // pred_region
      %108 = dma.done [#allocation9], 2560
    $region49: #{tpu_custom_call.1} parent=1 // pred_fallthru
      _
    // Predicated region
    $region50: #{tpu_custom_call.1} parent=1 // pred_check
      _
    $region51: #{tpu_custom_call.1} parent=1 // pred_check_branch
      %110 = sbr.rel (0) target = $region53
    $region52: #{tpu_custom_call.1} parent=1 // pred_region
      %111 = dma.done [#allocation12], 2560
    $region53: #{tpu_custom_call.1} parent=1 // pred_fallthru
      _
    %v112 = vld [vmem:[#allocation2] sm:$0xff]
    %v113 = vld [vmem:[#allocation2 + $0x8] sm:$0xff]
    %v114 = vld [vmem:[#allocation5] sm:$0xff]
    %v115 = vld [vmem:[#allocation5 + $0x8] sm:$0xff]
    %v116 = vld [vmem:[#allocation7] sm:$0xff]
    %v117 = vld [vmem:[#allocation7 + $0x8] sm:$0xff]
    %v118 = vld [vmem:[#allocation8] sm:$0xff]
    %v119 = vld [vmem:[#allocation8 + $0x8] sm:$0xff]
    %v120 = vld [vmem:[#allocation10] sm:$0xff]
    %v121 = vld [vmem:[#allocation10 + $0x8] sm:$0xff]
    %v122 = vld [vmem:[#allocation10 + $0x10] sm:$0xff]
    %v123 = vld [vmem:[#allocation10 + $0x18] sm:$0xff]
    %v124 = vld [vmem:[#allocation11] sm:$0xff]
    %v125 = vld [vmem:[#allocation11 + $0x8] sm:$0xff]
    %v126 = vld [vmem:[#allocation11 + $0x10] sm:$0xff]
    %v127 = vld [vmem:[#allocation11 + $0x18] sm:$0xff]
    %vm128 = vcmask 261120
    %v130 = vsel %vm128, %v114, 0
    %v133 = vsel %vm128, %v115, 0
    %135 = vmatprep.subr.mxu0 0.0
    %136 = vmatpush1.msra.mxu0 0.0
    %137 = vmatprep.subr.mxu0 0.0
    %138 = vmatpush1.msra.mxu0 0.0
    %139 = vmatprep.subr.mxu0 0.0
    %140 = vmatpush1.msra.mxu0 0.0
    %141 = vmatprep.subr.mxu0 0.0
    %142 = vmatpush1.msra.mxu0 0.0
    %143 = vmatprep.subr.mxu0 0.0
    %144 = vmatpush1.msra.mxu0 0.0
    %145 = vmatprep.subr.mxu0 0.0
    %146 = vmatpush1.msra.mxu0 0.0
    %147 = vmatprep.subr.mxu0 0.0
    %148 = vmatpush1.msra.mxu0 0.0
    %149 = vmatprep.subr.mxu0 0.0
    %150 = vmatpush1.msra.mxu0 0.0
    %151 = vmatprep.subr.mxu0 0.0
    %152 = vmatpush1.msra.mxu0 0.0
    %153 = vmatprep.subr.mxu0 0.0
    %154 = vmatpush1.msra.mxu0 0.0
    %155 = vmatprep.subr.mxu0 0.0
    %156 = vmatpush1.msra.mxu0 0.0
    %157 = vmatprep.subr.mxu0 0.0
    %158 = vmatpush1.msra.mxu0 0.0
    %159 = vmatprep.subr.mxu0 0.0
    %160 = vmatpush1.msra.mxu0 %v127
    %161 = vmatprep.subr.mxu0 0.0
    %162 = vmatpush1.msra.mxu0 %v126
    %163 = vmatprep.subr.mxu0 0.0
    %164 = vmatpush1.msra.mxu0 %v125
    %165 = vmatprep.subr.mxu0 0.0
    %166 = vmatpush1.msra.mxu0 %v124
    %167 = vmatprep.subr.mxu0 0.0
    %168 = vmatpush2.msra.mxu0 0.0
    %169 = vmatprep.subr.mxu0 0.0
    %170 = vmatpush2.msra.mxu0 0.0
    %171 = vmatprep.subr.mxu0 0.0
    %172 = vmatpush2.msra.mxu0 0.0
    %173 = vmatprep.subr.mxu0 0.0
    %174 = vmatpush2.msra.mxu0 0.0
    %175 = vmatprep.subr.mxu0 0.0
    %176 = vmatpush2.msra.mxu0 0.0
    %177 = vmatprep.subr.mxu0 0.0
    %178 = vmatpush2.msra.mxu0 0.0
    %179 = vmatprep.subr.mxu0 0.0
    %180 = vmatpush2.msra.mxu0 0.0
    %181 = vmatprep.subr.mxu0 0.0
    %182 = vmatpush2.msra.mxu0 0.0
    %183 = vmatprep.subr.mxu0 0.0
    %184 = vmatpush2.msra.mxu0 0.0
    %185 = vmatprep.subr.mxu0 0.0
    %186 = vmatpush2.msra.mxu0 0.0
    %187 = vmatprep.subr.mxu0 0.0
    %188 = vmatpush2.msra.mxu0 0.0
    %189 = vmatprep.subr.mxu0 0.0
    %190 = vmatpush2.msra.mxu0 0.0
    %191 = vmatprep.subr.mxu0 0.0
    %192 = vmatpush2.msra.mxu0 0.0
    %193 = vmatprep.subr.mxu0 0.0
    %194 = vmatpush2.msra.mxu0 0.0
    %195 = vmatprep.subr.mxu0 0.0
    %196 = vmatpush2.msra.mxu0 0.0
    %197 = vmatprep.subr.mxu0 0.0
    %198 = vmatpush2.msra.mxu0 0.0
    %199 = vmatprep.mubr.f32.mxu0 0.0
    %200 = vmatmul.mubr.f32.gmra.mxu0 %v130
    %v201 = vpop.f32.mrf.mxu0
    %v202 = vadd.f32 0.0, %v201
    %v203 = vpop.f32.mrf.mxu0
    %204 = vmatprep.mubr.f32.mxu0 0.0
    %205 = vmatmul.mubr.f32.gmra.mxu0 %v133
    %v206 = vpop.f32.mrf.mxu0
    %v207 = vadd.f32 0.0, %v206
    %v208 = vpop.f32.mrf.mxu0
    %209 = vdwg.mxu0
    %v211 = vsel %vm128, %v112, 0
    %v214 = vsel %vm128, %v113, 0
    %216 = vmatprep.subr.mxu0 0.0
    %217 = vmatpush1.msra.mxu0 0.0
    %218 = vmatprep.subr.mxu0 0.0
    %219 = vmatpush1.msra.mxu0 0.0
    %220 = vmatprep.subr.mxu0 0.0
    %221 = vmatpush1.msra.mxu0 0.0
    %222 = vmatprep.subr.mxu0 0.0
    %223 = vmatpush1.msra.mxu0 0.0
    %224 = vmatprep.subr.mxu0 0.0
    %225 = vmatpush1.msra.mxu0 0.0
    %226 = vmatprep.subr.mxu0 0.0
    %227 = vmatpush1.msra.mxu0 0.0
    %228 = vmatprep.subr.mxu0 0.0
    %229 = vmatpush1.msra.mxu0 0.0
    %230 = vmatprep.subr.mxu0 0.0
    %231 = vmatpush1.msra.mxu0 0.0
    %232 = vmatprep.subr.mxu0 0.0
    %233 = vmatpush1.msra.mxu0 0.0
    %234 = vmatprep.subr.mxu0 0.0
    %235 = vmatpush1.msra.mxu0 0.0
    %236 = vmatprep.subr.mxu0 0.0
    %237 = vmatpush1.msra.mxu0 0.0
    %238 = vmatprep.subr.mxu0 0.0
    %239 = vmatpush1.msra.mxu0 0.0
    %240 = vmatprep.subr.mxu0 0.0
    %241 = vmatpush1.msra.mxu0 %v123
    %242 = vmatprep.subr.mxu0 0.0
    %243 = vmatpush1.msra.mxu0 %v122
    %244 = vmatprep.subr.mxu0 0.0
    %245 = vmatpush1.msra.mxu0 %v121
    %246 = vmatprep.subr.mxu0 0.0
    %247 = vmatpush1.msra.mxu0 %v120
    %248 = vmatprep.subr.mxu0 0.0
    %249 = vmatpush2.msra.mxu0 0.0
    %250 = vmatprep.subr.mxu0 0.0
    %251 = vmatpush2.msra.mxu0 0.0
    %252 = vmatprep.subr.mxu0 0.0
    %253 = vmatpush2.msra.mxu0 0.0
    %254 = vmatprep.subr.mxu0 0.0
    %255 = vmatpush2.msra.mxu0 0.0
    %256 = vmatprep.subr.mxu0 0.0
    %257 = vmatpush2.msra.mxu0 0.0
    %258 = vmatprep.subr.mxu0 0.0
    %259 = vmatpush2.msra.mxu0 0.0
    %260 = vmatprep.subr.mxu0 0.0
    %261 = vmatpush2.msra.mxu0 0.0
    %262 = vmatprep.subr.mxu0 0.0
    %263 = vmatpush2.msra.mxu0 0.0
    %264 = vmatprep.subr.mxu0 0.0
    %265 = vmatpush2.msra.mxu0 0.0
    %266 = vmatprep.subr.mxu0 0.0
    %267 = vmatpush2.msra.mxu0 0.0
    %268 = vmatprep.subr.mxu0 0.0
    %269 = vmatpush2.msra.mxu0 0.0
    %270 = vmatprep.subr.mxu0 0.0
    %271 = vmatpush2.msra.mxu0 0.0
    %272 = vmatprep.subr.mxu0 0.0
    %273 = vmatpush2.msra.mxu0 0.0
    %274 = vmatprep.subr.mxu0 0.0
    %275 = vmatpush2.msra.mxu0 0.0
    %276 = vmatprep.subr.mxu0 0.0
    %277 = vmatpush2.msra.mxu0 0.0
    %278 = vmatprep.subr.mxu0 0.0
    %279 = vmatpush2.msra.mxu0 0.0
    %280 = vmatprep.mubr.f32.mxu0 0.0
    %281 = vmatmul.mubr.f32.gmra.mxu0 %v211
    %v282 = vpop.f32.mrf.mxu0
    %v283 = vadd.f32 %v202, %v282
    %v284 = vpop.f32.mrf.mxu0
    %285 = vmatprep.mubr.f32.mxu0 0.0
    %286 = vmatmul.mubr.f32.gmra.mxu0 %v214
    %v287 = vpop.f32.mrf.mxu0
    %v288 = vadd.f32 %v207, %v287
    %v289 = vpop.f32.mrf.mxu0
    %290 = vdwg.mxu0
    %v291 = vld [vmem:[%s6] sm:$0x1]
    %v293 = vlaneseq
    %v294 = vshrl.u32 %v293, 7
    %v295 = vsub.s32 0, %v294
    %v296 = vrot.slane %v291, %v295
    %v298 = vadd.f32 %v283, %v296
    %v299 = vadd.f32 %v288, %v296
    %s300 = scalar_lea.vmem [#allocation10], 32
    %v301 = vld [vmem:[%s300] sm:$0xff]
    %v302 = vld [vmem:[%s300 + $0x8] sm:$0xff]
    %v303 = vld [vmem:[%s300 + $0x10] sm:$0xff]
    %v304 = vld [vmem:[%s300 + $0x18] sm:$0xff]
    %s305 = scalar_lea.vmem [#allocation11], 32
    %v306 = vld [vmem:[%s305] sm:$0xff]
    %v307 = vld [vmem:[%s305 + $0x8] sm:$0xff]
    %v308 = vld [vmem:[%s305 + $0x10] sm:$0xff]
    %v309 = vld [vmem:[%s305 + $0x18] sm:$0xff]
    %310 = vmatprep.subr.mxu0 0.0
    %311 = vmatpush1.msra.mxu0 0.0
    %312 = vmatprep.subr.mxu0 0.0
    %313 = vmatpush1.msra.mxu0 0.0
    %314 = vmatprep.subr.mxu0 0.0
    %315 = vmatpush1.msra.mxu0 0.0
    %316 = vmatprep.subr.mxu0 0.0
    %317 = vmatpush1.msra.mxu0 0.0
    %318 = vmatprep.subr.mxu0 0.0
    %319 = vmatpush1.msra.mxu0 0.0
    %320 = vmatprep.subr.mxu0 0.0
    %321 = vmatpush1.msra.mxu0 0.0
    %322 = vmatprep.subr.mxu0 0.0
    %323 = vmatpush1.msra.mxu0 0.0
    %324 = vmatprep.subr.mxu0 0.0
    %325 = vmatpush1.msra.mxu0 0.0
    %326 = vmatprep.subr.mxu0 0.0
    %327 = vmatpush1.msra.mxu0 0.0
    %328 = vmatprep.subr.mxu0 0.0
    %329 = vmatpush1.msra.mxu0 0.0
    %330 = vmatprep.subr.mxu0 0.0
    %331 = vmatpush1.msra.mxu0 0.0
    %332 = vmatprep.subr.mxu0 0.0
    %333 = vmatpush1.msra.mxu0 0.0
    %334 = vmatprep.subr.mxu0 0.0
    %335 = vmatpush1.msra.mxu0 %v309
    %336 = vmatprep.subr.mxu0 0.0
    %337 = vmatpush1.msra.mxu0 %v308
    %338 = vmatprep.subr.mxu0 0.0
    %339 = vmatpush1.msra.mxu0 %v307
    %340 = vmatprep.subr.mxu0 0.0
    %341 = vmatpush1.msra.mxu0 %v306
    %342 = vmatprep.subr.mxu0 0.0
    %343 = vmatpush2.msra.mxu0 0.0
    %344 = vmatprep.subr.mxu0 0.0
    %345 = vmatpush2.msra.mxu0 0.0
    %346 = vmatprep.subr.mxu0 0.0
    %347 = vmatpush2.msra.mxu0 0.0
    %348 = vmatprep.subr.mxu0 0.0
    %349 = vmatpush2.msra.mxu0 0.0
    %350 = vmatprep.subr.mxu0 0.0
    %351 = vmatpush2.msra.mxu0 0.0
    %352 = vmatprep.subr.mxu0 0.0
    %353 = vmatpush2.msra.mxu0 0.0
    %354 = vmatprep.subr.mxu0 0.0
    %355 = vmatpush2.msra.mxu0 0.0
    %356 = vmatprep.subr.mxu0 0.0
    %357 = vmatpush2.msra.mxu0 0.0
    %358 = vmatprep.subr.mxu0 0.0
    %359 = vmatpush2.msra.mxu0 0.0
    %360 = vmatprep.subr.mxu0 0.0
    %361 = vmatpush2.msra.mxu0 0.0
    %362 = vmatprep.subr.mxu0 0.0
    %363 = vmatpush2.msra.mxu0 0.0
    %364 = vmatprep.subr.mxu0 0.0
    %365 = vmatpush2.msra.mxu0 0.0
    %366 = vmatprep.subr.mxu0 0.0
    %367 = vmatpush2.msra.mxu0 0.0
    %368 = vmatprep.subr.mxu0 0.0
    %369 = vmatpush2.msra.mxu0 0.0
    %370 = vmatprep.subr.mxu0 0.0
    %371 = vmatpush2.msra.mxu0 0.0
    %372 = vmatprep.subr.mxu0 0.0
    %373 = vmatpush2.msra.mxu0 0.0
    %374 = vmatprep.mubr.f32.mxu0 0.0
    %375 = vmatmul.mubr.f32.gmra.mxu0 %v130
    %v376 = vpop.f32.mrf.mxu0
    %v377 = vadd.f32 0.0, %v376
    %v378 = vpop.f32.mrf.mxu0
    %379 = vmatprep.mubr.f32.mxu0 0.0
    %380 = vmatmul.mubr.f32.gmra.mxu0 %v133
    %v381 = vpop.f32.mrf.mxu0
    %v382 = vadd.f32 0.0, %v381
    %v383 = vpop.f32.mrf.mxu0
    %384 = vdwg.mxu0
    %385 = vmatprep.subr.mxu0 0.0
    %386 = vmatpush1.msra.mxu0 0.0
    %387 = vmatprep.subr.mxu0 0.0
    %388 = vmatpush1.msra.mxu0 0.0
    %389 = vmatprep.subr.mxu0 0.0
    %390 = vmatpush1.msra.mxu0 0.0
    %391 = vmatprep.subr.mxu0 0.0
    %392 = vmatpush1.msra.mxu0 0.0
    %393 = vmatprep.subr.mxu0 0.0
    %394 = vmatpush1.msra.mxu0 0.0
    %395 = vmatprep.subr.mxu0 0.0
    %396 = vmatpush1.msra.mxu0 0.0
    %397 = vmatprep.subr.mxu0 0.0
    %398 = vmatpush1.msra.mxu0 0.0
    %399 = vmatprep.subr.mxu0 0.0
    %400 = vmatpush1.msra.mxu0 0.0
    %401 = vmatprep.subr.mxu0 0.0
    %402 = vmatpush1.msra.mxu0 0.0
    %403 = vmatprep.subr.mxu0 0.0
    %404 = vmatpush1.msra.mxu0 0.0
    %405 = vmatprep.subr.mxu0 0.0
    %406 = vmatpush1.msra.mxu0 0.0
    %407 = vmatprep.subr.mxu0 0.0
    %408 = vmatpush1.msra.mxu0 0.0
    %409 = vmatprep.subr.mxu0 0.0
    %410 = vmatpush1.msra.mxu0 %v304
    %411 = vmatprep.subr.mxu0 0.0
    %412 = vmatpush1.msra.mxu0 %v303
    %413 = vmatprep.subr.mxu0 0.0
    %414 = vmatpush1.msra.mxu0 %v302
    %415 = vmatprep.subr.mxu0 0.0
    %416 = vmatpush1.msra.mxu0 %v301
    %417 = vmatprep.subr.mxu0 0.0
    %418 = vmatpush2.msra.mxu0 0.0
    %419 = vmatprep.subr.mxu0 0.0
    %420 = vmatpush2.msra.mxu0 0.0
    %421 = vmatprep.subr.mxu0 0.0
    %422 = vmatpush2.msra.mxu0 0.0
    %423 = vmatprep.subr.mxu0 0.0
    %424 = vmatpush2.msra.mxu0 0.0
    %425 = vmatprep.subr.mxu0 0.0
    %426 = vmatpush2.msra.mxu0 0.0
    %427 = vmatprep.subr.mxu0 0.0
    %428 = vmatpush2.msra.mxu0 0.0
    %429 = vmatprep.subr.mxu0 0.0
    %430 = vmatpush2.msra.mxu0 0.0
    %431 = vmatprep.subr.mxu0 0.0
    %432 = vmatpush2.msra.mxu0 0.0
    %433 = vmatprep.subr.mxu0 0.0
    %434 = vmatpush2.msra.mxu0 0.0
    %435 = vmatprep.subr.mxu0 0.0
    %436 = vmatpush2.msra.mxu0 0.0
    %437 = vmatprep.subr.mxu0 0.0
    %438 = vmatpush2.msra.mxu0 0.0
    %439 = vmatprep.subr.mxu0 0.0
    %440 = vmatpush2.msra.mxu0 0.0
    %441 = vmatprep.subr.mxu0 0.0
    %442 = vmatpush2.msra.mxu0 0.0
    %443 = vmatprep.subr.mxu0 0.0
    %444 = vmatpush2.msra.mxu0 0.0
    %445 = vmatprep.subr.mxu0 0.0
    %446 = vmatpush2.msra.mxu0 0.0
    %447 = vmatprep.subr.mxu0 0.0
    %448 = vmatpush2.msra.mxu0 0.0
    %449 = vmatprep.mubr.f32.mxu0 0.0
    %450 = vmatmul.mubr.f32.gmra.mxu0 %v211
    %v451 = vpop.f32.mrf.mxu0
    %v452 = vadd.f32 %v377, %v451
    %v453 = vpop.f32.mrf.mxu0
    %454 = vmatprep.mubr.f32.mxu0 0.0
    %455 = vmatmul.mubr.f32.gmra.mxu0 %v214
    %v456 = vpop.f32.mrf.mxu0
    %v457 = vadd.f32 %v382, %v456
    %v458 = vpop.f32.mrf.mxu0
    %459 = vdwg.mxu0
    %s460 = scalar_lea.vmem %s6, 1
    %v461 = vld [vmem:[%s460] sm:$0x1]
    %v463 = vlaneseq
    %v464 = vshrl.u32 %v463, 7
    %v465 = vsub.s32 0, %v464
    %v466 = vrot.slane %v461, %v465
    %v468 = vadd.f32 %v452, %v466
    %v469 = vadd.f32 %v457, %v466
    %s470 = scalar_lea.vmem [#allocation10], 64
    %v471 = vld [vmem:[%s470] sm:$0xff]
    %v472 = vld [vmem:[%s470 + $0x8] sm:$0xff]
    %v473 = vld [vmem:[%s470 + $0x10] sm:$0xff]
    %v474 = vld [vmem:[%s470 + $0x18] sm:$0xff]
    %s475 = scalar_lea.vmem [#allocation11], 64
    %v476 = vld [vmem:[%s475] sm:$0xff]
    %v477 = vld [vmem:[%s475 + $0x8] sm:$0xff]
    %v478 = vld [vmem:[%s475 + $0x10] sm:$0xff]
    %v479 = vld [vmem:[%s475 + $0x18] sm:$0xff]
    %480 = vmatprep.subr.mxu0 0.0
    %481 = vmatpush1.msra.mxu0 0.0
    %482 = vmatprep.subr.mxu0 0.0
    %483 = vmatpush1.msra.mxu0 0.0
    %484 = vmatprep.subr.mxu0 0.0
    %485 = vmatpush1.msra.mxu0 0.0
    %486 = vmatprep.subr.mxu0 0.0
    %487 = vmatpush1.msra.mxu0 0.0
    %488 = vmatprep.subr.mxu0 0.0
    %489 = vmatpush1.msra.mxu0 0.0
    %490 = vmatprep.subr.mxu0 0.0
    %491 = vmatpush1.msra.mxu0 0.0
    %492 = vmatprep.subr.mxu0 0.0
    %493 = vmatpush1.msra.mxu0 0.0
    %494 = vmatprep.subr.mxu0 0.0
    %495 = vmatpush1.msra.mxu0 0.0
    %496 = vmatprep.subr.mxu0 0.0
    %497 = vmatpush1.msra.mxu0 0.0
    %498 = vmatprep.subr.mxu0 0.0
    %499 = vmatpush1.msra.mxu0 0.0
    %500 = vmatprep.subr.mxu0 0.0
    %501 = vmatpush1.msra.mxu0 0.0
    %502 = vmatprep.subr.mxu0 0.0
    %503 = vmatpush1.msra.mxu0 0.0
    %504 = vmatprep.subr.mxu0 0.0
    %505 = vmatpush1.msra.mxu0 %v479
    %506 = vmatprep.subr.mxu0 0.0
    %507 = vmatpush1.msra.mxu0 %v478
    %508 = vmatprep.subr.mxu0 0.0
    %509 = vmatpush1.msra.mxu0 %v477
    %510 = vmatprep.subr.mxu0 0.0
    %511 = vmatpush1.msra.mxu0 %v476
    %512 = vmatprep.subr.mxu0 0.0
    %513 = vmatpush2.msra.mxu0 0.0
    %514 = vmatprep.subr.mxu0 0.0
    %515 = vmatpush2.msra.mxu0 0.0
    %516 = vmatprep.subr.mxu0 0.0
    %517 = vmatpush2.msra.mxu0 0.0
    %518 = vmatprep.subr.mxu0 0.0
    %519 = vmatpush2.msra.mxu0 0.0
    %520 = vmatprep.subr.mxu0 0.0
    %521 = vmatpush2.msra.mxu0 0.0
    %522 = vmatprep.subr.mxu0 0.0
    %523 = vmatpush2.msra.mxu0 0.0
    %524 = vmatprep.subr.mxu0 0.0
    %525 = vmatpush2.msra.mxu0 0.0
    %526 = vmatprep.subr.mxu0 0.0
    %527 = vmatpush2.msra.mxu0 0.0
    %528 = vmatprep.subr.mxu0 0.0
    %529 = vmatpush2.msra.mxu0 0.0
    %530 = vmatprep.subr.mxu0 0.0
    %531 = vmatpush2.msra.mxu0 0.0
    %532 = vmatprep.subr.mxu0 0.0
    %533 = vmatpush2.msra.mxu0 0.0
    %534 = vmatprep.subr.mxu0 0.0
    %535 = vmatpush2.msra.mxu0 0.0
    %536 = vmatprep.subr.mxu0 0.0
    %537 = vmatpush2.msra.mxu0 0.0
    %538 = vmatprep.subr.mxu0 0.0
    %539 = vmatpush2.msra.mxu0 0.0
    %540 = vmatprep.subr.mxu0 0.0
    %541 = vmatpush2.msra.mxu0 0.0
    %542 = vmatprep.subr.mxu0 0.0
    %543 = vmatpush2.msra.mxu0 0.0
    %544 = vmatprep.mubr.f32.mxu0 0.0
    %545 = vmatmul.mubr.f32.gmra.mxu0 %v130
    %v546 = vpop.f32.mrf.mxu0
    %v547 = vadd.f32 0.0, %v546
    %v548 = vpop.f32.mrf.mxu0
    %549 = vmatprep.mubr.f32.mxu0 0.0
    %550 = vmatmul.mubr.f32.gmra.mxu0 %v133
    %v551 = vpop.f32.mrf.mxu0
    %v552 = vadd.f32 0.0, %v551
    %v553 = vpop.f32.mrf.mxu0
    %554 = vdwg.mxu0
    %555 = vmatprep.subr.mxu0 0.0
    %556 = vmatpush1.msra.mxu0 0.0
    %557 = vmatprep.subr.mxu0 0.0
    %558 = vmatpush1.msra.mxu0 0.0
    %559 = vmatprep.subr.mxu0 0.0
    %560 = vmatpush1.msra.mxu0 0.0
    %561 = vmatprep.subr.mxu0 0.0
    %562 = vmatpush1.msra.mxu0 0.0
    %563 = vmatprep.subr.mxu0 0.0
    %564 = vmatpush1.msra.mxu0 0.0
    %565 = vmatprep.subr.mxu0 0.0
    %566 = vmatpush1.msra.mxu0 0.0
    %567 = vmatprep.subr.mxu0 0.0
    %568 = vmatpush1.msra.mxu0 0.0
    %569 = vmatprep.subr.mxu0 0.0
    %570 = vmatpush1.msra.mxu0 0.0
    %571 = vmatprep.subr.mxu0 0.0
    %572 = vmatpush1.msra.mxu0 0.0
    %573 = vmatprep.subr.mxu0 0.0
    %574 = vmatpush1.msra.mxu0 0.0
    %575 = vmatprep.subr.mxu0 0.0
    %576 = vmatpush1.msra.mxu0 0.0
    %577 = vmatprep.subr.mxu0 0.0
    %578 = vmatpush1.msra.mxu0 0.0
    %579 = vmatprep.subr.mxu0 0.0
    %580 = vmatpush1.msra.mxu0 %v474
    %581 = vmatprep.subr.mxu0 0.0
    %582 = vmatpush1.msra.mxu0 %v473
    %583 = vmatprep.subr.mxu0 0.0
    %584 = vmatpush1.msra.mxu0 %v472
    %585 = vmatprep.subr.mxu0 0.0
    %586 = vmatpush1.msra.mxu0 %v471
    %587 = vmatprep.subr.mxu0 0.0
    %588 = vmatpush2.msra.mxu0 0.0
    %589 = vmatprep.subr.mxu0 0.0
    %590 = vmatpush2.msra.mxu0 0.0
    %591 = vmatprep.subr.mxu0 0.0
    %592 = vmatpush2.msra.mxu0 0.0
    %593 = vmatprep.subr.mxu0 0.0
    %594 = vmatpush2.msra.mxu0 0.0
    %595 = vmatprep.subr.mxu0 0.0
    %596 = vmatpush2.msra.mxu0 0.0
    %597 = vmatprep.subr.mxu0 0.0
    %598 = vmatpush2.msra.mxu0 0.0
    %599 = vmatprep.subr.mxu0 0.0
    %600 = vmatpush2.msra.mxu0 0.0
    %601 = vmatprep.subr.mxu0 0.0
    %602 = vmatpush2.msra.mxu0 0.0
    %603 = vmatprep.subr.mxu0 0.0
    %604 = vmatpush2.msra.mxu0 0.0
    %605 = vmatprep.subr.mxu0 0.0
    %606 = vmatpush2.msra.mxu0 0.0
    %607 = vmatprep.subr.mxu0 0.0
    %608 = vmatpush2.msra.mxu0 0.0
    %609 = vmatprep.subr.mxu0 0.0
    %610 = vmatpush2.msra.mxu0 0.0
    %611 = vmatprep.subr.mxu0 0.0
    %612 = vmatpush2.msra.mxu0 0.0
    %613 = vmatprep.subr.mxu0 0.0
    %614 = vmatpush2.msra.mxu0 0.0
    %615 = vmatprep.subr.mxu0 0.0
    %616 = vmatpush2.msra.mxu0 0.0
    %617 = vmatprep.subr.mxu0 0.0
    %618 = vmatpush2.msra.mxu0 0.0
    %619 = vmatprep.mubr.f32.mxu0 0.0
    %620 = vmatmul.mubr.f32.gmra.mxu0 %v211
    %v621 = vpop.f32.mrf.mxu0
    %v622 = vadd.f32 %v547, %v621
    %v623 = vpop.f32.mrf.mxu0
    %624 = vmatprep.mubr.f32.mxu0 0.0
    %625 = vmatmul.mubr.f32.gmra.mxu0 %v214
    %v626 = vpop.f32.mrf.mxu0
    %v627 = vadd.f32 %v552, %v626
    %v628 = vpop.f32.mrf.mxu0
    %629 = vdwg.mxu0
    %s630 = scalar_lea.vmem %s6, 2
    %v631 = vld [vmem:[%s630] sm:$0x1]
    %v633 = vlaneseq
    %v634 = vshrl.u32 %v633, 7
    %v635 = vsub.s32 0, %v634
    %v636 = vrot.slane %v631, %v635
    %v638 = vadd.f32 %v622, %v636
    %v639 = vadd.f32 %v627, %v636
    %s640 = scalar_lea.vmem [#allocation10], 96
    %v641 = vld [vmem:[%s640] sm:$0xff]
    %v642 = vld [vmem:[%s640 + $0x8] sm:$0xff]
    %v643 = vld [vmem:[%s640 + $0x10] sm:$0xff]
    %v644 = vld [vmem:[%s640 + $0x18] sm:$0xff]
    %s645 = scalar_lea.vmem [#allocation11], 96
    %v646 = vld [vmem:[%s645] sm:$0xff]
    %v647 = vld [vmem:[%s645 + $0x8] sm:$0xff]
    %v648 = vld [vmem:[%s645 + $0x10] sm:$0xff]
    %v649 = vld [vmem:[%s645 + $0x18] sm:$0xff]
    %650 = vmatprep.subr.mxu0 0.0
    %651 = vmatpush1.msra.mxu0 0.0
    %652 = vmatprep.subr.mxu0 0.0
    %653 = vmatpush1.msra.mxu0 0.0
    %654 = vmatprep.subr.mxu0 0.0
    %655 = vmatpush1.msra.mxu0 0.0
    %656 = vmatprep.subr.mxu0 0.0
    %657 = vmatpush1.msra.mxu0 0.0
    %658 = vmatprep.subr.mxu0 0.0
    %659 = vmatpush1.msra.mxu0 0.0
    %660 = vmatprep.subr.mxu0 0.0
    %661 = vmatpush1.msra.mxu0 0.0
    %662 = vmatprep.subr.mxu0 0.0
    %663 = vmatpush1.msra.mxu0 0.0
    %664 = vmatprep.subr.mxu0 0.0
    %665 = vmatpush1.msra.mxu0 0.0
    %666 = vmatprep.subr.mxu0 0.0
    %667 = vmatpush1.msra.mxu0 0.0
    %668 = vmatprep.subr.mxu0 0.0
    %669 = vmatpush1.msra.mxu0 0.0
    %670 = vmatprep.subr.mxu0 0.0
    %671 = vmatpush1.msra.mxu0 0.0
    %672 = vmatprep.subr.mxu0 0.0
    %673 = vmatpush1.msra.mxu0 0.0
    %674 = vmatprep.subr.mxu0 0.0
    %675 = vmatpush1.msra.mxu0 %v649
    %676 = vmatprep.subr.mxu0 0.0
    %677 = vmatpush1.msra.mxu0 %v648
    %678 = vmatprep.subr.mxu0 0.0
    %679 = vmatpush1.msra.mxu0 %v647
    %680 = vmatprep.subr.mxu0 0.0
    %681 = vmatpush1.msra.mxu0 %v646
    %682 = vmatprep.subr.mxu0 0.0
    %683 = vmatpush2.msra.mxu0 0.0
    %684 = vmatprep.subr.mxu0 0.0
    %685 = vmatpush2.msra.mxu0 0.0
    %686 = vmatprep.subr.mxu0 0.0
    %687 = vmatpush2.msra.mxu0 0.0
    %688 = vmatprep.subr.mxu0 0.0
    %689 = vmatpush2.msra.mxu0 0.0
    %690 = vmatprep.subr.mxu0 0.0
    %691 = vmatpush2.msra.mxu0 0.0
    %692 = vmatprep.subr.mxu0 0.0
    %693 = vmatpush2.msra.mxu0 0.0
    %694 = vmatprep.subr.mxu0 0.0
    %695 = vmatpush2.msra.mxu0 0.0
    %696 = vmatprep.subr.mxu0 0.0
    %697 = vmatpush2.msra.mxu0 0.0
    %698 = vmatprep.subr.mxu0 0.0
    %699 = vmatpush2.msra.mxu0 0.0
    %700 = vmatprep.subr.mxu0 0.0
    %701 = vmatpush2.msra.mxu0 0.0
    %702 = vmatprep.subr.mxu0 0.0
    %703 = vmatpush2.msra.mxu0 0.0
    %704 = vmatprep.subr.mxu0 0.0
    %705 = vmatpush2.msra.mxu0 0.0
    %706 = vmatprep.subr.mxu0 0.0
    %707 = vmatpush2.msra.mxu0 0.0
    %708 = vmatprep.subr.mxu0 0.0
    %709 = vmatpush2.msra.mxu0 0.0
    %710 = vmatprep.subr.mxu0 0.0
    %711 = vmatpush2.msra.mxu0 0.0
    %712 = vmatprep.subr.mxu0 0.0
    %713 = vmatpush2.msra.mxu0 0.0
    %714 = vmatprep.mubr.f32.mxu0 0.0
    %715 = vmatmul.mubr.f32.gmra.mxu0 %v130
    %v716 = vpop.f32.mrf.mxu0
    %v717 = vadd.f32 0.0, %v716
    %v718 = vpop.f32.mrf.mxu0
    %719 = vmatprep.mubr.f32.mxu0 0.0
    %720 = vmatmul.mubr.f32.gmra.mxu0 %v133
    %v721 = vpop.f32.mrf.mxu0
    %v722 = vadd.f32 0.0, %v721
    %v723 = vpop.f32.mrf.mxu0
    %724 = vdwg.mxu0
    %725 = vmatprep.subr.mxu0 0.0
    %726 = vmatpush1.msra.mxu0 0.0
    %727 = vmatprep.subr.mxu0 0.0
    %728 = vmatpush1.msra.mxu0 0.0
    %729 = vmatprep.subr.mxu0 0.0
    %730 = vmatpush1.msra.mxu0 0.0
    %731 = vmatprep.subr.mxu0 0.0
    %732 = vmatpush1.msra.mxu0 0.0
    %733 = vmatprep.subr.mxu0 0.0
    %734 = vmatpush1.msra.mxu0 0.0
    %735 = vmatprep.subr.mxu0 0.0
    %736 = vmatpush1.msra.mxu0 0.0
    %737 = vmatprep.subr.mxu0 0.0
    %738 = vmatpush1.msra.mxu0 0.0
    %739 = vmatprep.subr.mxu0 0.0
    %740 = vmatpush1.msra.mxu0 0.0
    %741 = vmatprep.subr.mxu0 0.0
    %742 = vmatpush1.msra.mxu0 0.0
    %743 = vmatprep.subr.mxu0 0.0
    %744 = vmatpush1.msra.mxu0 0.0
    %745 = vmatprep.subr.mxu0 0.0
    %746 = vmatpush1.msra.mxu0 0.0
    %747 = vmatprep.subr.mxu0 0.0
    %748 = vmatpush1.msra.mxu0 0.0
    %749 = vmatprep.subr.mxu0 0.0
    %750 = vmatpush1.msra.mxu0 %v644
    %751 = vmatprep.subr.mxu0 0.0
    %752 = vmatpush1.msra.mxu0 %v643
    %753 = vmatprep.subr.mxu0 0.0
    %754 = vmatpush1.msra.mxu0 %v642
    %755 = vmatprep.subr.mxu0 0.0
    %756 = vmatpush1.msra.mxu0 %v641
    %757 = vmatprep.subr.mxu0 0.0
    %758 = vmatpush2.msra.mxu0 0.0
    %759 = vmatprep.subr.mxu0 0.0
    %760 = vmatpush2.msra.mxu0 0.0
    %761 = vmatprep.subr.mxu0 0.0
    %762 = vmatpush2.msra.mxu0 0.0
    %763 = vmatprep.subr.mxu0 0.0
    %764 = vmatpush2.msra.mxu0 0.0
    %765 = vmatprep.subr.mxu0 0.0
    %766 = vmatpush2.msra.mxu0 0.0
    %767 = vmatprep.subr.mxu0 0.0
    %768 = vmatpush2.msra.mxu0 0.0
    %769 = vmatprep.subr.mxu0 0.0
    %770 = vmatpush2.msra.mxu0 0.0
    %771 = vmatprep.subr.mxu0 0.0
    %772 = vmatpush2.msra.mxu0 0.0
    %773 = vmatprep.subr.mxu0 0.0
    %774 = vmatpush2.msra.mxu0 0.0
    %775 = vmatprep.subr.mxu0 0.0
    %776 = vmatpush2.msra.mxu0 0.0
    %777 = vmatprep.subr.mxu0 0.0
    %778 = vmatpush2.msra.mxu0 0.0
    %779 = vmatprep.subr.mxu0 0.0
    %780 = vmatpush2.msra.mxu0 0.0
    %781 = vmatprep.subr.mxu0 0.0
    %782 = vmatpush2.msra.mxu0 0.0
    %783 = vmatprep.subr.mxu0 0.0
    %784 = vmatpush2.msra.mxu0 0.0
    %785 = vmatprep.subr.mxu0 0.0
    %786 = vmatpush2.msra.mxu0 0.0
    %787 = vmatprep.subr.mxu0 0.0
    %788 = vmatpush2.msra.mxu0 0.0
    %789 = vmatprep.mubr.f32.mxu0 0.0
    %790 = vmatmul.mubr.f32.gmra.mxu0 %v211
    %v791 = vpop.f32.mrf.mxu0
    %v792 = vadd.f32 %v717, %v791
    %v793 = vpop.f32.mrf.mxu0
    %794 = vmatprep.mubr.f32.mxu0 0.0
    %795 = vmatmul.mubr.f32.gmra.mxu0 %v214
    %v796 = vpop.f32.mrf.mxu0
    %v797 = vadd.f32 %v722, %v796
    %v798 = vpop.f32.mrf.mxu0
    %799 = vdwg.mxu0
    %s800 = scalar_lea.vmem %s6, 3
    %v801 = vld [vmem:[%s800] sm:$0x1]
    %v803 = vlaneseq
    %v804 = vshrl.u32 %v803, 7
    %v805 = vsub.s32 0, %v804
    %v806 = vrot.slane %v801, %v805
    %v808 = vadd.f32 %v792, %v806
    %v809 = vadd.f32 %v797, %v806
    %s810 = scalar_lea.vmem [#allocation10], 128
    %v811 = vld [vmem:[%s810] sm:$0xff]
    %v812 = vld [vmem:[%s810 + $0x8] sm:$0xff]
    %v813 = vld [vmem:[%s810 + $0x10] sm:$0xff]
    %v814 = vld [vmem:[%s810 + $0x18] sm:$0xff]
    %s815 = scalar_lea.vmem [#allocation11], 128
    %v816 = vld [vmem:[%s815] sm:$0xff]
    %v817 = vld [vmem:[%s815 + $0x8] sm:$0xff]
    %v818 = vld [vmem:[%s815 + $0x10] sm:$0xff]
    %v819 = vld [vmem:[%s815 + $0x18] sm:$0xff]
    %820 = vmatprep.subr.mxu0 0.0
    %821 = vmatpush1.msra.mxu0 0.0
    %822 = vmatprep.subr.mxu0 0.0
    %823 = vmatpush1.msra.mxu0 0.0
    %824 = vmatprep.subr.mxu0 0.0
    %825 = vmatpush1.msra.mxu0 0.0
    %826 = vmatprep.subr.mxu0 0.0
    %827 = vmatpush1.msra.mxu0 0.0
    %828 = vmatprep.subr.mxu0 0.0
    %829 = vmatpush1.msra.mxu0 0.0
    %830 = vmatprep.subr.mxu0 0.0
    %831 = vmatpush1.msra.mxu0 0.0
    %832 = vmatprep.subr.mxu0 0.0
    %833 = vmatpush1.msra.mxu0 0.0
    %834 = vmatprep.subr.mxu0 0.0
    %835 = vmatpush1.msra.mxu0 0.0
    %836 = vmatprep.subr.mxu0 0.0
    %837 = vmatpush1.msra.mxu0 0.0
    %838 = vmatprep.subr.mxu0 0.0
    %839 = vmatpush1.msra.mxu0 0.0
    %840 = vmatprep.subr.mxu0 0.0
    %841 = vmatpush1.msra.mxu0 0.0
    %842 = vmatprep.subr.mxu0 0.0
    %843 = vmatpush1.msra.mxu0 0.0
    %844 = vmatprep.subr.mxu0 0.0
    %845 = vmatpush1.msra.mxu0 %v819
    %846 = vmatprep.subr.mxu0 0.0
    %847 = vmatpush1.msra.mxu0 %v818
    %848 = vmatprep.subr.mxu0 0.0
    %849 = vmatpush1.msra.mxu0 %v817
    %850 = vmatprep.subr.mxu0 0.0
    %851 = vmatpush1.msra.mxu0 %v816
    %852 = vmatprep.subr.mxu0 0.0
    %853 = vmatpush2.msra.mxu0 0.0
    %854 = vmatprep.subr.mxu0 0.0
    %855 = vmatpush2.msra.mxu0 0.0
    %856 = vmatprep.subr.mxu0 0.0
    %857 = vmatpush2.msra.mxu0 0.0
    %858 = vmatprep.subr.mxu0 0.0
    %859 = vmatpush2.msra.mxu0 0.0
    %860 = vmatprep.subr.mxu0 0.0
    %861 = vmatpush2.msra.mxu0 0.0
    %862 = vmatprep.subr.mxu0 0.0
    %863 = vmatpush2.msra.mxu0 0.0
    %864 = vmatprep.subr.mxu0 0.0
    %865 = vmatpush2.msra.mxu0 0.0
    %866 = vmatprep.subr.mxu0 0.0
    %867 = vmatpush2.msra.mxu0 0.0
    %868 = vmatprep.subr.mxu0 0.0
    %869 = vmatpush2.msra.mxu0 0.0
    %870 = vmatprep.subr.mxu0 0.0
    %871 = vmatpush2.msra.mxu0 0.0
    %872 = vmatprep.subr.mxu0 0.0
    %873 = vmatpush2.msra.mxu0 0.0
    %874 = vmatprep.subr.mxu0 0.0
    %875 = vmatpush2.msra.mxu0 0.0
    %876 = vmatprep.subr.mxu0 0.0
    %877 = vmatpush2.msra.mxu0 0.0
    %878 = vmatprep.subr.mxu0 0.0
    %879 = vmatpush2.msra.mxu0 0.0
    %880 = vmatprep.subr.mxu0 0.0
    %881 = vmatpush2.msra.mxu0 0.0
    %882 = vmatprep.subr.mxu0 0.0
    %883 = vmatpush2.msra.mxu0 0.0
    %884 = vmatprep.mubr.f32.mxu0 0.0
    %885 = vmatmul.mubr.f32.gmra.mxu0 %v130
    %v886 = vpop.f32.mrf.mxu0
    %v887 = vadd.f32 0.0, %v886
    %v888 = vpop.f32.mrf.mxu0
    %889 = vmatprep.mubr.f32.mxu0 0.0
    %890 = vmatmul.mubr.f32.gmra.mxu0 %v133
    %v891 = vpop.f32.mrf.mxu0
    %v892 = vadd.f32 0.0, %v891
    %v893 = vpop.f32.mrf.mxu0
    %894 = vdwg.mxu0
    %895 = vmatprep.subr.mxu0 0.0
    %896 = vmatpush1.msra.mxu0 0.0
    %897 = vmatprep.subr.mxu0 0.0
    %898 = vmatpush1.msra.mxu0 0.0
    %899 = vmatprep.subr.mxu0 0.0
    %900 = vmatpush1.msra.mxu0 0.0
    %901 = vmatprep.subr.mxu0 0.0
    %902 = vmatpush1.msra.mxu0 0.0
    %903 = vmatprep.subr.mxu0 0.0
    %904 = vmatpush1.msra.mxu0 0.0
    %905 = vmatprep.subr.mxu0 0.0
    %906 = vmatpush1.msra.mxu0 0.0
    %907 = vmatprep.subr.mxu0 0.0
    %908 = vmatpush1.msra.mxu0 0.0
    %909 = vmatprep.subr.mxu0 0.0
    %910 = vmatpush1.msra.mxu0 0.0
    %911 = vmatprep.subr.mxu0 0.0
    %912 = vmatpush1.msra.mxu0 0.0
    %913 = vmatprep.subr.mxu0 0.0
    %914 = vmatpush1.msra.mxu0 0.0
    %915 = vmatprep.subr.mxu0 0.0
    %916 = vmatpush1.msra.mxu0 0.0
    %917 = vmatprep.subr.mxu0 0.0
    %918 = vmatpush1.msra.mxu0 0.0
    %919 = vmatprep.subr.mxu0 0.0
    %920 = vmatpush1.msra.mxu0 %v814
    %921 = vmatprep.subr.mxu0 0.0
    %922 = vmatpush1.msra.mxu0 %v813
    %923 = vmatprep.subr.mxu0 0.0
    %924 = vmatpush1.msra.mxu0 %v812
    %925 = vmatprep.subr.mxu0 0.0
    %926 = vmatpush1.msra.mxu0 %v811
    %927 = vmatprep.subr.mxu0 0.0
    %928 = vmatpush2.msra.mxu0 0.0
    %929 = vmatprep.subr.mxu0 0.0
    %930 = vmatpush2.msra.mxu0 0.0
    %931 = vmatprep.subr.mxu0 0.0
    %932 = vmatpush2.msra.mxu0 0.0
    %933 = vmatprep.subr.mxu0 0.0
    %934 = vmatpush2.msra.mxu0 0.0
    %935 = vmatprep.subr.mxu0 0.0
    %936 = vmatpush2.msra.mxu0 0.0
    %937 = vmatprep.subr.mxu0 0.0
    %938 = vmatpush2.msra.mxu0 0.0
    %939 = vmatprep.subr.mxu0 0.0
    %940 = vmatpush2.msra.mxu0 0.0
    %941 = vmatprep.subr.mxu0 0.0
    %942 = vmatpush2.msra.mxu0 0.0
    %943 = vmatprep.subr.mxu0 0.0
    %944 = vmatpush2.msra.mxu0 0.0
    %945 = vmatprep.subr.mxu0 0.0
    %946 = vmatpush2.msra.mxu0 0.0
    %947 = vmatprep.subr.mxu0 0.0
    %948 = vmatpush2.msra.mxu0 0.0
    %949 = vmatprep.subr.mxu0 0.0
    %950 = vmatpush2.msra.mxu0 0.0
    %951 = vmatprep.subr.mxu0 0.0
    %952 = vmatpush2.msra.mxu0 0.0
    %953 = vmatprep.subr.mxu0 0.0
    %954 = vmatpush2.msra.mxu0 0.0
    %955 = vmatprep.subr.mxu0 0.0
    %956 = vmatpush2.msra.mxu0 0.0
    %957 = vmatprep.subr.mxu0 0.0
    %958 = vmatpush2.msra.mxu0 0.0
    %959 = vmatprep.mubr.f32.mxu0 0.0
    %960 = vmatmul.mubr.f32.gmra.mxu0 %v211
    %v961 = vpop.f32.mrf.mxu0
    %v962 = vadd.f32 %v887, %v961
    %v963 = vpop.f32.mrf.mxu0
    %964 = vmatprep.mubr.f32.mxu0 0.0
    %965 = vmatmul.mubr.f32.gmra.mxu0 %v214
    %v966 = vpop.f32.mrf.mxu0
    %v967 = vadd.f32 %v892, %v966
    %v968 = vpop.f32.mrf.mxu0
    %969 = vdwg.mxu0
    %s970 = scalar_lea.vmem %s6, 4
    %v971 = vld [vmem:[%s970] sm:$0x1]
    %v973 = vlaneseq
    %v974 = vshrl.u32 %v973, 7
    %v975 = vsub.s32 0, %v974
    %v976 = vrot.slane %v971, %v975
    %v978 = vadd.f32 %v962, %v976
    %v979 = vadd.f32 %v967, %v976
    %v980 = vxor.u32 %v468, 2147483648
    %v981 = vxor.u32 %v469, 2147483648
    %v982 = vmul.f32 %v980, 1.442695
    %v983 = vpow.pop %v982
    %v984 = vmul.f32 %v981, 1.442695
    %v985 = vpow.pop %v984
    %v986 = vadd.f32 %v983, 1.0
    %v987 = vadd.f32 %v985, 1.0
    %v988 = vrcp.pop %v986
    %v989 = vmul.f32 1.0, %v988
    %v990 = vrcp.pop %v987
    %v991 = vmul.f32 1.0, %v990
    %v992 = vmul.f32 %v116, %v989
    %v993 = vmul.f32 %v117, %v991
    %v994 = vxor.u32 %v638, 2147483648
    %v995 = vxor.u32 %v639, 2147483648
    %v996 = vmul.f32 %v994, 1.442695
    %v997 = vpow.pop %v996
    %v998 = vmul.f32 %v995, 1.442695
    %v999 = vpow.pop %v998
    %v1000 = vadd.f32 %v997, 1.0
    %v1001 = vadd.f32 %v999, 1.0
    %v1002 = vrcp.pop %v1000
    %v1003 = vmul.f32 1.0, %v1002
    %v1004 = vrcp.pop %v1001
    %v1005 = vmul.f32 1.0, %v1004
    %v1006 = vmul.f32 %v118, %v1003
    %v1007 = vmul.f32 %v119, %v1005
    %v1008 = vadd.f32 %v992, %v1006
    %v1009 = vadd.f32 %v993, %v1007
    %v1010 = vtanh.pop %v808
    %v1011 = vtanh.pop %v809
    %v1012 = vxor.u32 %v298, 2147483648
    %v1013 = vxor.u32 %v299, 2147483648
    %v1014 = vmul.f32 %v1012, 1.442695
    %v1015 = vpow.pop %v1014
    %v1016 = vmul.f32 %v1013, 1.442695
    %v1017 = vpow.pop %v1016
    %v1018 = vadd.f32 %v1015, 1.0
    %v1019 = vadd.f32 %v1017, 1.0
    %v1020 = vrcp.pop %v1018
    %v1021 = vmul.f32 1.0, %v1020
    %v1022 = vrcp.pop %v1019
    %v1023 = vmul.f32 1.0, %v1022
    %v1024 = vmul.f32 %v1010, %v1021
    %v1025 = vmul.f32 %v1011, %v1023
    %v1026 = vadd.f32 %v1008, %v1024
    %v1027 = vadd.f32 %v1009, %v1025
    %v1028 = vxor.u32 %v978, 2147483648
    %v1029 = vxor.u32 %v979, 2147483648
    %v1030 = vmul.f32 %v1028, 1.442695
    %v1031 = vpow.pop %v1030
    %v1032 = vmul.f32 %v1029, 1.442695
    %v1033 = vpow.pop %v1032
    %v1034 = vadd.f32 %v1031, 1.0
    %v1035 = vadd.f32 %v1033, 1.0
    %v1036 = vrcp.pop %v1034
    %v1037 = vmul.f32 1.0, %v1036
    %v1038 = vrcp.pop %v1035
    %v1039 = vmul.f32 1.0, %v1038
    %v1040 = vtanh.pop %v1026
    %v1041 = vtanh.pop %v1027
    %v1042 = vmul.f32 %v1037, %v1040
    %v1043 = vmul.f32 %v1039, %v1041
    %1044 = vst.msk [vmem:[#allocation14] sm:$0xff] %vm128, %v1026
    %1045 = vst.msk [vmem:[#allocation14 + $0x8] sm:$0xff] %vm128, %v1027
    %1046 = vst.msk [vmem:[#allocation13] sm:$0xff] %vm128, %v1042
    %1047 = vst.msk [vmem:[#allocation13 + $0x8] sm:$0xff] %vm128, %v1043
    // Predicated region
    $region54: #{tpu_custom_call.1} parent=1 // pred_check
      _
    $region55: #{tpu_custom_call.1} parent=1 // pred_check_branch
      %1049 = sbr.rel (0) target = $region57
    $region56: #{tpu_custom_call.1} parent=1 // pred_region
      %s1051 = ssub.s32 256, 256
      %1052 = vsyncadd [#allocation4], %s1051
      %s1053 = sshll.u32 [#allocation13], 4
      %s1054 = int_to_ptr.vmem [resolvable:$true] %s1053
      %1059 = dma.vmem_to_hbm [thread:$0]  %s1054, 256, %s7, [#allocation4], 128, 128, 8
    $region57: #{tpu_custom_call.1} parent=1 // pred_fallthru
      _
    // Predicated region
    $region58: #{tpu_custom_call.1} parent=1 // pred_check
      _
    $region59: #{tpu_custom_call.1} parent=1 // pred_check_branch
      %1061 = sbr.rel (0) target = $region61
    $region60: #{tpu_custom_call.1} parent=1 // pred_region
      %s1063 = ssub.s32 256, 256
      %1064 = vsyncadd [#allocation15], %s1063
      %s1065 = sshll.u32 [#allocation14], 4
      %s1066 = int_to_ptr.vmem [resolvable:$true] %s1065
      %1071 = dma.vmem_to_hbm [thread:$0]  %s1066, 256, %s8, [#allocation15], 128, 128, 8
    $region61: #{tpu_custom_call.1} parent=1 // pred_fallthru
      _
    // Predicated region
    $region62: #{tpu_custom_call.1} parent=1 // pred_check
      _
    $region63: #{tpu_custom_call.1} parent=1 // pred_check_branch
      %1073 = sbr.rel (0) target = $region65
    $region64: #{tpu_custom_call.1} parent=1 // pred_region
      %1074 = dma.done [#allocation4], 256
    $region65: #{tpu_custom_call.1} parent=1 // pred_fallthru
      _
    // Predicated region
    $region66: #{tpu_custom_call.1} parent=1 // pred_check
      _
    $region67: #{tpu_custom_call.1} parent=1 // pred_check_branch
      %1076 = sbr.rel (0) target = $region69
    $region68: #{tpu_custom_call.1} parent=1 // pred_region
      %1077 = dma.done [#allocation15], 256
    $region69: #{tpu_custom_call.1} parent=1 // pred_fallthru
      _
    %1078 = vsyncpa [#allocation3], 1
    %1079 = vsyncpa [#allocation6], 1
    %1080 = vsyncpa [#allocation9], 1
    %1081 = vsyncpa [#allocation12], 1
    %1082 = vsyncpa [#allocation4], 1
    %1083 = vsyncpa [#allocation15], 1

</llo_original>
